<compile_context>
chip_gen: v6e
topology: v6e:2x2x1
jax: 0.10.0
libtpu: 0.0.40
codegen_flags: <defaults>
</compile_context>

<pallas_src>
import functools

import jax
import jax.numpy as jnp
from jax.experimental import pallas as pl
from jax.experimental.pallas import tpu as pltpu


def _round_up(x: int, m: int) -> int:
    return (x + m - 1) // m * m


def _fused_mlp_kernel(*refs, activations):
    """Fused MLP over one row tile.

    refs = (x_ref, w0, b0, w1, b1, ..., o_ref)
      x_ref : (tm, K0_pad)  f32
      w_l   : (Kl_pad, Nl_pad)  compute dtype (bf16 or f32)
      b_l   : (1, Nl_pad)       f32
      o_ref : (tm, Nout_pad)    f32
    """
    nl = len(activations)
    x_ref = refs[0]
    o_ref = refs[1 + 2 * nl]

    h = x_ref[...]                              # f32, stays on-chip
    for l in range(nl):                         # unrolled at trace time
        w_ref = refs[1 + 2 * l]
        b_ref = refs[2 + 2 * l]
        acc = jnp.dot(h.astype(w_ref.dtype), w_ref[...],
                      preferred_element_type=jnp.float32)
        acc = acc + b_ref[...]                  # (1, N_pad) broadcasts over rows
        act = activations[l]
        if act == "relu":
            acc = jnp.maximum(acc, 0.0)
        elif act == "sigmoid":
            acc = jax.nn.sigmoid(acc)
        h = acc
    o_ref[...] = h.astype(o_ref.dtype)


@functools.partial(jax.jit, static_argnames=("activations", "block_rows", "out_dim"))
def mlp_forward(x, weights, biases, *, activations, block_rows, out_dim):
    """x: (..., input_dim) -> (..., out_dim). weights/biases are padded."""
    lead = x.shape[:-1]
    k_in = x.shape[-1]
    k_pad = weights[0].shape[0]
    n_out_pad = weights[-1].shape[1]

    x2d = x.reshape(-1, k_in).astype(jnp.float32)
    m = x2d.shape[0]
    if k_pad != k_in:
        x2d = jnp.pad(x2d, ((0, 0), (0, k_pad - k_in)))

    tm = min(block_rows, _round_up(max(m, 1), 8))
    m_pad = _round_up(m, tm)
    if m_pad != m:
        x2d = jnp.pad(x2d, ((0, m_pad - m), (0, 0)))

    in_specs = [pl.BlockSpec((tm, k_pad), lambda i: (i, 0))]
    operands = [x2d]
    for w, b in zip(weights, biases):
        # Constant index_map -> weights/bias are DMA'd once, stay VMEM-resident.
        in_specs.append(pl.BlockSpec(w.shape, lambda i: (0, 0)))
        in_specs.append(pl.BlockSpec(b.shape, lambda i: (0, 0)))
        operands.append(w)
        operands.append(b)

    kernel = functools.partial(_fused_mlp_kernel, activations=activations)

    out = pl.pallas_call(
        kernel,
        out_shape=jax.ShapeDtypeStruct((m_pad, n_out_pad), jnp.float32),
        grid=(m_pad // tm,),
        in_specs=in_specs,
        out_specs=pl.BlockSpec((tm, n_out_pad), lambda i: (i, 0)),
        compiler_params=pltpu.CompilerParams(
            dimension_semantics=("parallel",)),
    )(*operands)

    return out[:m, :out_dim].reshape(*lead, out_dim)


class MLP:
    """JAX/Pallas port of the PyTorch MLP module (single fused kernel)."""

    def __init__(self, input_dim, hidden_dim, output_dim, num_layers,
                 sigmoid_output=False, key=None,
                 compute_dtype=jnp.bfloat16, block_rows=256):
        self.num_layers = num_layers
        self.sigmoid_output = sigmoid_output
        self.output_dim = output_dim
        self.block_rows = block_rows

        h = [hidden_dim] * (num_layers - 1)
        dims_in = [input_dim] + h
        dims_out = h + [output_dim]
        if key is None:
            key = jax.random.PRNGKey(0)

        acts = []
        self.params = []          # unpadded f32 (for reference / inspection)
        w_padded, b_padded = [], []
        for li, (n_in, n_out) in enumerate(zip(dims_in, dims_out)):
            key, kw, kb = jax.random.split(key, 3)
            bound = float(n_in) ** -0.5
            # PyTorch nn.Linear default init: U(-1/sqrt(fan_in), 1/sqrt(fan_in))
            w = jax.random.uniform(kw, (n_in, n_out), jnp.float32, -bound, bound)
            b = jax.random.uniform(kb, (n_out,), jnp.float32, -bound, bound)
            self.params.append((w, b))

            kp = _round_up(n_in, 128)
            np_ = _round_up(n_out, 128)
            wp = jnp.zeros((kp, np_), jnp.float32).at[:n_in, :n_out].set(w)
            bp = jnp.zeros((1, np_), jnp.float32).at[0, :n_out].set(b)
            w_padded.append(wp.astype(compute_dtype))   # bf16 weights for MXU
            b_padded.append(bp)                          # bias stays f32

            if li < num_layers - 1:
                acts.append("relu")
            else:
                acts.append("sigmoid" if sigmoid_output else "none")

        self.activations = tuple(acts)
        self._weights = tuple(w_padded)
        self._biases = tuple(b_padded)

    def __call__(self, x):
        return mlp_forward(x, self._weights, self._biases,
                           activations=self.activations,
                           block_rows=self.block_rows,
                           out_dim=self.output_dim)


def _reference(x, params, num_layers, sigmoid_output):
    x2d = x.reshape(-1, x.shape[-1])
    for i, (w, b) in enumerate(params):
        y = x2d @ w + b
        x2d = jnp.maximum(y, 0.0) if i < num_layers - 1 else y
    if sigmoid_output:
        x2d = jax.nn.sigmoid(x2d)
    return x2d.reshape(*x.shape[:-1], x2d.shape[-1])


if __name__ == "__main__":
    key = jax.random.PRNGKey(0)
    k_in, k_params = jax.random.split(key)

    # Small shapes consistent with the module's forward.
    batch, seq, input_dim, hidden_dim, output_dim, num_layers = 2, 8, 32, 64, 16, 3
    x = jax.random.normal(k_in, (batch, seq, input_dim), jnp.float32)
    ref = None

    # 1) f32 compute path: tight structural check (fusion / padding / tiling).
    mlp_f32 = MLP(input_dim, hidden_dim, output_dim, num_layers,
                  sigmoid_output=True, key=k_params, compute_dtype=jnp.float32)
    out_f32 = jax.block_until_ready(mlp_f32(x))
    ref = _reference(x, mlp_f32.params, num_layers, True)
    assert out_f32.shape == (batch, seq, output_dim)
    assert jnp.allclose(out_f32, ref, atol=1e-4, rtol=1e-4)

    # 2) default bf16 MXU path: looser tolerance for bf16 rounding of x/W.
    mlp_bf16 = MLP(input_dim, hidden_dim, output_dim, num_layers,
                   sigmoid_output=True, key=k_params)
    out_bf16 = jax.block_until_ready(mlp_bf16(x))
    assert out_bf16.shape == (batch, seq, output_dim)
    assert jnp.allclose(out_bf16, ref, atol=3e-2, rtol=3e-2)

    print("KERNEL_OK")
</pallas_src>

<mosaic_0001>
module attributes {stable_mosaic.version = 11 : i64} {
  func.func @_fused_mlp_kernel(%arg0: i32, %arg1: memref<16x128xf32, #tpu.memory_space<vmem>>, %arg2: memref<128x128xf32, #tpu.memory_space<vmem>>, %arg3: memref<1x128xf32, #tpu.memory_space<vmem>>, %arg4: memref<128x128xf32, #tpu.memory_space<vmem>>, %arg5: memref<1x128xf32, #tpu.memory_space<vmem>>, %arg6: memref<128x128xf32, #tpu.memory_space<vmem>>, %arg7: memref<1x128xf32, #tpu.memory_space<vmem>>, %arg8: memref<16x128xf32, #tpu.memory_space<vmem>>) attributes {dimension_semantics = [#tpu.dimension_semantics<parallel>], iteration_bounds = array<i64: 1>, scalar_prefetch = 0 : i64, scratch_operands = 0 : i64, tpu.core_type = #tpu.core_type<tc>, window_params = [{transform_indices = @transform_0, window_bounds = array<i64: 16, 128>}, {pipeline_mode = #tpu.pipeline_mode<synchronous>, transform_indices = @transform_1, window_bounds = array<i64: 128, 128>}, {pipeline_mode = #tpu.pipeline_mode<synchronous>, transform_indices = @transform_2, window_bounds = array<i64: 1, 128>}, {pipeline_mode = #tpu.pipeline_mode<synchronous>, transform_indices = @transform_3, window_bounds = array<i64: 128, 128>}, {pipeline_mode = #tpu.pipeline_mode<synchronous>, transform_indices = @transform_4, window_bounds = array<i64: 1, 128>}, {pipeline_mode = #tpu.pipeline_mode<synchronous>, transform_indices = @transform_5, window_bounds = array<i64: 128, 128>}, {pipeline_mode = #tpu.pipeline_mode<synchronous>, transform_indices = @transform_6, window_bounds = array<i64: 1, 128>}, {transform_indices = @transform_7, window_bounds = array<i64: 16, 128>}]} {
    %c0 = arith.constant 0 : index
    %c0_0 = arith.constant 0 : index
    %0 = vector.load %arg1[%c0, %c0_0] : memref<16x128xf32, #tpu.memory_space<vmem>>, vector<16x128xf32>
    %c0_1 = arith.constant 0 : index
    %c0_2 = arith.constant 0 : index
    %1 = vector.load %arg2[%c0_1, %c0_2] : memref<128x128xf32, #tpu.memory_space<vmem>>, vector<128x128xf32>
    %cst = arith.constant dense<0.000000e+00> : vector<16x128xf32>
    %2 = tpu.matmul %0, %1, %cst {dimension_numbers = #tpu.dot_dimension_numbers<[1], [0], [0], [1], [0, 0, 1, 1], [], []>} : vector<16x128xf32>, vector<128x128xf32>, vector<16x128xf32> -> vector<16x128xf32>
    %c0_3 = arith.constant 0 : index
    %c0_4 = arith.constant 0 : index
    %3 = vector.load %arg3[%c0_3, %c0_4] : memref<1x128xf32, #tpu.memory_space<vmem>>, vector<1x128xf32>
    %4 = vector.broadcast %3 : vector<1x128xf32> to vector<16x128xf32>
    %5 = arith.addf %2, %4 : vector<16x128xf32>
    %cst_5 = arith.constant 0.000000e+00 : f32
    %6 = vector.broadcast %cst_5 : f32 to vector<16x128xf32>
    %7 = arith.maximumf %5, %6 : vector<16x128xf32>
    %c0_6 = arith.constant 0 : index
    %c0_7 = arith.constant 0 : index
    %8 = vector.load %arg4[%c0_6, %c0_7] : memref<128x128xf32, #tpu.memory_space<vmem>>, vector<128x128xf32>
    %cst_8 = arith.constant dense<0.000000e+00> : vector<16x128xf32>
    %9 = tpu.matmul %7, %8, %cst_8 {dimension_numbers = #tpu.dot_dimension_numbers<[1], [0], [0], [1], [0, 0, 1, 1], [], []>} : vector<16x128xf32>, vector<128x128xf32>, vector<16x128xf32> -> vector<16x128xf32>
    %c0_9 = arith.constant 0 : index
    %c0_10 = arith.constant 0 : index
    %10 = vector.load %arg5[%c0_9, %c0_10] : memref<1x128xf32, #tpu.memory_space<vmem>>, vector<1x128xf32>
    %11 = vector.broadcast %10 : vector<1x128xf32> to vector<16x128xf32>
    %12 = arith.addf %9, %11 : vector<16x128xf32>
    %cst_11 = arith.constant 0.000000e+00 : f32
    %13 = vector.broadcast %cst_11 : f32 to vector<16x128xf32>
    %14 = arith.maximumf %12, %13 : vector<16x128xf32>
    %c0_12 = arith.constant 0 : index
    %c0_13 = arith.constant 0 : index
    %15 = vector.load %arg6[%c0_12, %c0_13] : memref<128x128xf32, #tpu.memory_space<vmem>>, vector<128x128xf32>
    %cst_14 = arith.constant dense<0.000000e+00> : vector<16x128xf32>
    %16 = tpu.matmul %14, %15, %cst_14 {dimension_numbers = #tpu.dot_dimension_numbers<[1], [0], [0], [1], [0, 0, 1, 1], [], []>} : vector<16x128xf32>, vector<128x128xf32>, vector<16x128xf32> -> vector<16x128xf32>
    %c0_15 = arith.constant 0 : index
    %c0_16 = arith.constant 0 : index
    %17 = vector.load %arg7[%c0_15, %c0_16] : memref<1x128xf32, #tpu.memory_space<vmem>>, vector<1x128xf32>
    %18 = vector.broadcast %17 : vector<1x128xf32> to vector<16x128xf32>
    %19 = arith.addf %16, %18 : vector<16x128xf32>
    %20 = arith.negf %19 : vector<16x128xf32>
    %21 = math.exp %20 : vector<16x128xf32>
    %cst_17 = arith.constant 1.000000e+00 : f32
    %22 = vector.broadcast %cst_17 : f32 to vector<16x128xf32>
    %23 = arith.addf %22, %21 : vector<16x128xf32>
    %24 = arith.divf %22, %23 : vector<16x128xf32>
    %c0_18 = arith.constant 0 : index
    %c0_19 = arith.constant 0 : index
    %25 = vector.load %arg8[%c0_18, %c0_19] : memref<16x128xf32, #tpu.memory_space<vmem>>, vector<16x128xf32>
    tpu.vector_store %arg8[%c0_18, %c0_19], %24 {strides = array<i32>} : memref<16x128xf32, #tpu.memory_space<vmem>>, vector<16x128xf32>,
    return
  }
  func.func @transform_0(%arg0: i32) -> (i32, i32) {
    %c0_i32 = arith.constant 0 : i32
    %c0_i32_0 = arith.constant 0 : i32
    return %arg0, %c0_i32 : i32, i32
  }
  func.func @transform_1(%arg0: i32) -> (i32, i32) {
    %c0_i32 = arith.constant 0 : i32
    %c0_i32_0 = arith.constant 0 : i32
    %c0_i32_1 = arith.constant 0 : i32
    return %c0_i32, %c0_i32_0 : i32, i32
  }
  func.func @transform_2(%arg0: i32) -> (i32, i32) {
    %c0_i32 = arith.constant 0 : i32
    %c0_i32_0 = arith.constant 0 : i32
    %c0_i32_1 = arith.constant 0 : i32
    return %c0_i32, %c0_i32_0 : i32, i32
  }
  func.func @transform_3(%arg0: i32) -> (i32, i32) {
    %c0_i32 = arith.constant 0 : i32
    %c0_i32_0 = arith.constant 0 : i32
    %c0_i32_1 = arith.constant 0 : i32
    return %c0_i32, %c0_i32_0 : i32, i32
  }
  func.func @transform_4(%arg0: i32) -> (i32, i32) {
    %c0_i32 = arith.constant 0 : i32
    %c0_i32_0 = arith.constant 0 : i32
    %c0_i32_1 = arith.constant 0 : i32
    return %c0_i32, %c0_i32_0 : i32, i32
  }
  func.func @transform_5(%arg0: i32) -> (i32, i32) {
    %c0_i32 = arith.constant 0 : i32
    %c0_i32_0 = arith.constant 0 : i32
    %c0_i32_1 = arith.constant 0 : i32
    return %c0_i32, %c0_i32_0 : i32, i32
  }
  func.func @transform_6(%arg0: i32) -> (i32, i32) {
    %c0_i32 = arith.constant 0 : i32
    %c0_i32_0 = arith.constant 0 : i32
    %c0_i32_1 = arith.constant 0 : i32
    return %c0_i32, %c0_i32_0 : i32, i32
  }
  func.func @transform_7(%arg0: i32) -> (i32, i32) {
    %c0_i32 = arith.constant 0 : i32
    %c0_i32_0 = arith.constant 0 : i32
    return %arg0, %c0_i32 : i32, i32
  }
}

</mosaic_0001>

<llo_original>
// kernel: mlp_forward.1
$region0: #{mlp_forward.1}
  #allocation0 [shape = 'u32[]', space=smem, size = 0x4, offset = 0x4, fixed_abs, tag = 'smem constant byte address 0x4 - core index']
  #allocation1 [shape = 'u32[144,128]{1,0:T(1,128)}', space=vmem, size = 0x12000, scoped, tag = 'internal scratch']
  %s0 = inlined_call_operand.vmem [shape: f32[16,128], index: 0, kind: input, shape index: {}]
  %s1 = inlined_call_operand.hbm [shape: f32[128,128], index: 1, kind: input, shape index: {}]
  %s2 = inlined_call_operand.vmem [shape: f32[1,128], index: 2, kind: input, shape index: {}]
  %s3 = inlined_call_operand.hbm [shape: f32[128,128], index: 3, kind: input, shape index: {}]
  %s4 = inlined_call_operand.vmem [shape: f32[1,128], index: 4, kind: input, shape index: {}]
  %s5 = inlined_call_operand.hbm [shape: f32[128,128], index: 5, kind: input, shape index: {}]
  %s6 = inlined_call_operand.vmem [shape: f32[1,128], index: 6, kind: input, shape index: {}]
  %s7 = inlined_call_operand.vmem [shape: f32[16,128], index: 7, kind: output, shape index: {}]
  %s8 = sld [smem:[#allocation0]]
  $region50: #{mlp_forward.1} parent=0
    _
  %s10 = ssub.s32 1, %s8
  %s11 = scalar_select 0, %s10, %s8
  $region1: #{mlp_forward.1} parent=0
    #allocation2 [shape = 'u8[65536]{0}', space=vmem, size = 0x10000, scoped, tag = 'input window, operand 1, single buffered']
    #allocation3 [shape = 's32[1]{0}', space=sflag, size = 0x4, scoped, tag = 'scoped memory for mlp_forward.1']
    #allocation4 [shape = 'u8[65536]{0}', space=vmem, size = 0x10000, scoped, tag = 'input window, operand 3, single buffered']
    #allocation5 [shape = 's32[1]{0}', space=sflag, size = 0x4, scoped, tag = 'scoped memory for mlp_forward.1']
    #allocation6 [shape = 'u8[65536]{0}', space=vmem, size = 0x10000, scoped, tag = 'input window, operand 5, single buffered']
    %12 = vsyncpa [#allocation3], 0
    %13 = vsyncpa [#allocation5], 0
    // Predicated region
    $region2: #{mlp_forward.1} parent=1 // pred_check
      _
    $region3: #{mlp_forward.1} parent=1 // pred_check_branch
      %15 = sbr.rel (0) target = $region5
    $region4: #{mlp_forward.1} parent=1 // pred_region
      _
    $region5: #{mlp_forward.1} parent=1 // pred_fallthru
      _
    // Predicated region
    $region6: #{mlp_forward.1} parent=1 // pred_check
      _
    $region7: #{mlp_forward.1} parent=1 // pred_check_branch
      %17 = sbr.rel (0) target = $region9
    $region8: #{mlp_forward.1} parent=1 // pred_region
      %s19 = ssub.s32 2048, 2048
      %20 = vsyncadd [#allocation3], %s19
      %s21 = sshll.u32 [#allocation2], 4
      %s22 = int_to_ptr.vmem [resolvable:$true] %s21
      %27 = dma.hbm_to_vmem [thread:$0]  %s1, 2048, %s22, [#allocation3], 128, 128, 8
    $region9: #{mlp_forward.1} parent=1 // pred_fallthru
      _
    // Predicated region
    $region10: #{mlp_forward.1} parent=1 // pred_check
      _
    $region11: #{mlp_forward.1} parent=1 // pred_check_branch
      %29 = sbr.rel (0) target = $region13
    $region12: #{mlp_forward.1} parent=1 // pred_region
      _
    $region13: #{mlp_forward.1} parent=1 // pred_fallthru
      _
    // Predicated region
    $region14: #{mlp_forward.1} parent=1 // pred_check
      _
    $region15: #{mlp_forward.1} parent=1 // pred_check_branch
      %31 = sbr.rel (0) target = $region17
    $region16: #{mlp_forward.1} parent=1 // pred_region
      %s33 = ssub.s32 2048, 2048
      %34 = vsyncadd [#allocation5], %s33
      %s35 = sshll.u32 [#allocation4], 4
      %s36 = int_to_ptr.vmem [resolvable:$true] %s35
      %41 = dma.hbm_to_vmem [thread:$0]  %s3, 2048, %s36, [#allocation5], 128, 128, 8
    $region17: #{mlp_forward.1} parent=1 // pred_fallthru
      _
    // Predicated region
    $region18: #{mlp_forward.1} parent=1 // pred_check
      _
    $region19: #{mlp_forward.1} parent=1 // pred_check_branch
      %43 = sbr.rel (0) target = $region21
    $region20: #{mlp_forward.1} parent=1 // pred_region
      _
    $region21: #{mlp_forward.1} parent=1 // pred_fallthru
      _
    // Predicated region
    $region22: #{mlp_forward.1} parent=1 // pred_check
      _
    $region23: #{mlp_forward.1} parent=1 // pred_check_branch
      %45 = sbr.rel (0) target = $region25
    $region24: #{mlp_forward.1} parent=1 // pred_region
      %s47 = ssub.s32 2048, 2048
      %48 = vsyncadd [#allocation5], %s47
      %s49 = sshll.u32 [#allocation6], 4
      %s50 = int_to_ptr.vmem [resolvable:$true] %s49
      %55 = dma.hbm_to_vmem [thread:$0]  %s5, 2048, %s50, [#allocation5], 128, 128, 8
    $region25: #{mlp_forward.1} parent=1 // pred_fallthru
      _
    // Predicated region
    $region26: #{mlp_forward.1} parent=1 // pred_check
      _
    $region27: #{mlp_forward.1} parent=1 // pred_check_branch
      %57 = sbr.rel (0) target = $region29
    $region28: #{mlp_forward.1} parent=1 // pred_region
      _
    $region29: #{mlp_forward.1} parent=1 // pred_fallthru
      _
    // Predicated region
    $region30: #{mlp_forward.1} parent=1 // pred_check
      _
    $region31: #{mlp_forward.1} parent=1 // pred_check_branch
      %59 = sbr.rel (0) target = $region33
    $region32: #{mlp_forward.1} parent=1 // pred_region
      %60 = dma.done [#allocation3], 2048
    $region33: #{mlp_forward.1} parent=1 // pred_fallthru
      _
    // Predicated region
    $region34: #{mlp_forward.1} parent=1 // pred_check
      _
    $region35: #{mlp_forward.1} parent=1 // pred_check_branch
      %62 = sbr.rel (0) target = $region37
    $region36: #{mlp_forward.1} parent=1 // pred_region
      %63 = dma.done [#allocation5], 2048
    $region37: #{mlp_forward.1} parent=1 // pred_fallthru
      _
    // Predicated region
    $region38: #{mlp_forward.1} parent=1 // pred_check
      _
    $region39: #{mlp_forward.1} parent=1 // pred_check_branch
      %65 = sbr.rel (0) target = $region41
    $region40: #{mlp_forward.1} parent=1 // pred_region
      %66 = dma.done [#allocation5], 2048
    $region41: #{mlp_forward.1} parent=1 // pred_fallthru
      _
    %v67 = vld [vmem:[%s0] sm:$0xff]
    %v68 = vld [vmem:[%s0 + $0x8] sm:$0xff]
    %v69 = vld [vmem:[#allocation2] sm:$0xff]
    %v70 = vld [vmem:[#allocation2 + $0x8] sm:$0xff]
    %v71 = vld [vmem:[#allocation2 + $0x10] sm:$0xff]
    %v72 = vld [vmem:[#allocation2 + $0x18] sm:$0xff]
    %v73 = vld [vmem:[#allocation2 + $0x20] sm:$0xff]
    %v74 = vld [vmem:[#allocation2 + $0x28] sm:$0xff]
    %v75 = vld [vmem:[#allocation2 + $0x30] sm:$0xff]
    %v76 = vld [vmem:[#allocation2 + $0x38] sm:$0xff]
    %v77 = vld [vmem:[#allocation2 + $0x40] sm:$0xff]
    %v78 = vld [vmem:[#allocation2 + $0x48] sm:$0xff]
    %v79 = vld [vmem:[#allocation2 + $0x50] sm:$0xff]
    %v80 = vld [vmem:[#allocation2 + $0x58] sm:$0xff]
    %v81 = vld [vmem:[#allocation2 + $0x60] sm:$0xff]
    %v82 = vld [vmem:[#allocation2 + $0x68] sm:$0xff]
    %v83 = vld [vmem:[#allocation2 + $0x70] sm:$0xff]
    %v84 = vld [vmem:[#allocation2 + $0x78] sm:$0xff]
    %v85 = vld [vmem:[%s2] sm:$0x1]
    %v87 = vlaneseq
    %v88 = vshrl.u32 %v87, 7
    %v89 = vsub.s32 0, %v88
    %v90 = vrot.slane %v85, %v89
    %92 = vmatprep.subr.mxu0 0.0
    %93 = vmatpush1.msra.mxu0 %v84
    %94 = vmatprep.subr.mxu0 0.0
    %95 = vmatpush1.msra.mxu0 %v83
    %96 = vmatprep.subr.mxu0 0.0
    %97 = vmatpush1.msra.mxu0 %v82
    %98 = vmatprep.subr.mxu0 0.0
    %99 = vmatpush1.msra.mxu0 %v81
    %100 = vmatprep.subr.mxu0 0.0
    %101 = vmatpush1.msra.mxu0 %v80
    %102 = vmatprep.subr.mxu0 0.0
    %103 = vmatpush1.msra.mxu0 %v79
    %104 = vmatprep.subr.mxu0 0.0
    %105 = vmatpush1.msra.mxu0 %v78
    %106 = vmatprep.subr.mxu0 0.0
    %107 = vmatpush1.msra.mxu0 %v77
    %108 = vmatprep.subr.mxu0 0.0
    %109 = vmatpush1.msra.mxu0 %v76
    %110 = vmatprep.subr.mxu0 0.0
    %111 = vmatpush1.msra.mxu0 %v75
    %112 = vmatprep.subr.mxu0 0.0
    %113 = vmatpush1.msra.mxu0 %v74
    %114 = vmatprep.subr.mxu0 0.0
    %115 = vmatpush1.msra.mxu0 %v73
    %116 = vmatprep.subr.mxu0 0.0
    %117 = vmatpush1.msra.mxu0 %v72
    %118 = vmatprep.subr.mxu0 0.0
    %119 = vmatpush1.msra.mxu0 %v71
    %120 = vmatprep.subr.mxu0 0.0
    %121 = vmatpush1.msra.mxu0 %v70
    %122 = vmatprep.subr.mxu0 0.0
    %123 = vmatpush1.msra.mxu0 %v69
    %124 = vmatprep.subr.mxu0 0.0
    %125 = vmatpush2.msra.mxu0 0.0
    %126 = vmatprep.subr.mxu0 0.0
    %127 = vmatpush2.msra.mxu0 0.0
    %128 = vmatprep.subr.mxu0 0.0
    %129 = vmatpush2.msra.mxu0 0.0
    %130 = vmatprep.subr.mxu0 0.0
    %131 = vmatpush2.msra.mxu0 0.0
    %132 = vmatprep.subr.mxu0 0.0
    %133 = vmatpush2.msra.mxu0 0.0
    %134 = vmatprep.subr.mxu0 0.0
    %135 = vmatpush2.msra.mxu0 0.0
    %136 = vmatprep.subr.mxu0 0.0
    %137 = vmatpush2.msra.mxu0 0.0
    %138 = vmatprep.subr.mxu0 0.0
    %139 = vmatpush2.msra.mxu0 0.0
    %140 = vmatprep.subr.mxu0 0.0
    %141 = vmatpush2.msra.mxu0 0.0
    %142 = vmatprep.subr.mxu0 0.0
    %143 = vmatpush2.msra.mxu0 0.0
    %144 = vmatprep.subr.mxu0 0.0
    %145 = vmatpush2.msra.mxu0 0.0
    %146 = vmatprep.subr.mxu0 0.0
    %147 = vmatpush2.msra.mxu0 0.0
    %148 = vmatprep.subr.mxu0 0.0
    %149 = vmatpush2.msra.mxu0 0.0
    %150 = vmatprep.subr.mxu0 0.0
    %151 = vmatpush2.msra.mxu0 0.0
    %152 = vmatprep.subr.mxu0 0.0
    %153 = vmatpush2.msra.mxu0 0.0
    %154 = vmatprep.subr.mxu0 0.0
    %155 = vmatpush2.msra.mxu0 0.0
    %156 = vmatprep.mubr.f32.mxu0 0.0
    %157 = vmatmul.mubr.f32.gmra.mxu0 %v67
    %v158 = vpop.f32.mrf.mxu0
    %v159 = vadd.f32 %v90, %v158
    %v160 = vpop.f32.mrf.mxu0
    %161 = vmatprep.mubr.f32.mxu0 0.0
    %162 = vmatmul.mubr.f32.gmra.mxu0 %v68
    %v163 = vpop.f32.mrf.mxu0
    %v164 = vadd.f32 %v90, %v163
    %v165 = vpop.f32.mrf.mxu0
    %166 = vdwg.mxu0
    %v167 = vmax.f32 %v159, 0.0
    %v168 = vmax.f32 %v164, 0.0
    %v169 = vld [vmem:[#allocation4] sm:$0xff]
    %v170 = vld [vmem:[#allocation4 + $0x8] sm:$0xff]
    %v171 = vld [vmem:[#allocation4 + $0x10] sm:$0xff]
    %v172 = vld [vmem:[#allocation4 + $0x18] sm:$0xff]
    %v173 = vld [vmem:[#allocation4 + $0x20] sm:$0xff]
    %v174 = vld [vmem:[#allocation4 + $0x28] sm:$0xff]
    %v175 = vld [vmem:[#allocation4 + $0x30] sm:$0xff]
    %v176 = vld [vmem:[#allocation4 + $0x38] sm:$0xff]
    %v177 = vld [vmem:[#allocation4 + $0x40] sm:$0xff]
    %v178 = vld [vmem:[#allocation4 + $0x48] sm:$0xff]
    %v179 = vld [vmem:[#allocation4 + $0x50] sm:$0xff]
    %v180 = vld [vmem:[#allocation4 + $0x58] sm:$0xff]
    %v181 = vld [vmem:[#allocation4 + $0x60] sm:$0xff]
    %v182 = vld [vmem:[#allocation4 + $0x68] sm:$0xff]
    %v183 = vld [vmem:[#allocation4 + $0x70] sm:$0xff]
    %v184 = vld [vmem:[#allocation4 + $0x78] sm:$0xff]
    %v185 = vld [vmem:[%s4] sm:$0x1]
    %v187 = vlaneseq
    %v188 = vshrl.u32 %v187, 7
    %v189 = vsub.s32 0, %v188
    %v190 = vrot.slane %v185, %v189
    %192 = vmatprep.subr.mxu0 0.0
    %193 = vmatpush1.msra.mxu0 %v184
    %194 = vmatprep.subr.mxu0 0.0
    %195 = vmatpush1.msra.mxu0 %v183
    %196 = vmatprep.subr.mxu0 0.0
    %197 = vmatpush1.msra.mxu0 %v182
    %198 = vmatprep.subr.mxu0 0.0
    %199 = vmatpush1.msra.mxu0 %v181
    %200 = vmatprep.subr.mxu0 0.0
    %201 = vmatpush1.msra.mxu0 %v180
    %202 = vmatprep.subr.mxu0 0.0
    %203 = vmatpush1.msra.mxu0 %v179
    %204 = vmatprep.subr.mxu0 0.0
    %205 = vmatpush1.msra.mxu0 %v178
    %206 = vmatprep.subr.mxu0 0.0
    %207 = vmatpush1.msra.mxu0 %v177
    %208 = vmatprep.subr.mxu0 0.0
    %209 = vmatpush1.msra.mxu0 %v176
    %210 = vmatprep.subr.mxu0 0.0
    %211 = vmatpush1.msra.mxu0 %v175
    %212 = vmatprep.subr.mxu0 0.0
    %213 = vmatpush1.msra.mxu0 %v174
    %214 = vmatprep.subr.mxu0 0.0
    %215 = vmatpush1.msra.mxu0 %v173
    %216 = vmatprep.subr.mxu0 0.0
    %217 = vmatpush1.msra.mxu0 %v172
    %218 = vmatprep.subr.mxu0 0.0
    %219 = vmatpush1.msra.mxu0 %v171
    %220 = vmatprep.subr.mxu0 0.0
    %221 = vmatpush1.msra.mxu0 %v170
    %222 = vmatprep.subr.mxu0 0.0
    %223 = vmatpush1.msra.mxu0 %v169
    %224 = vmatprep.subr.mxu0 0.0
    %225 = vmatpush2.msra.mxu0 0.0
    %226 = vmatprep.subr.mxu0 0.0
    %227 = vmatpush2.msra.mxu0 0.0
    %228 = vmatprep.subr.mxu0 0.0
    %229 = vmatpush2.msra.mxu0 0.0
    %230 = vmatprep.subr.mxu0 0.0
    %231 = vmatpush2.msra.mxu0 0.0
    %232 = vmatprep.subr.mxu0 0.0
    %233 = vmatpush2.msra.mxu0 0.0
    %234 = vmatprep.subr.mxu0 0.0
    %235 = vmatpush2.msra.mxu0 0.0
    %236 = vmatprep.subr.mxu0 0.0
    %237 = vmatpush2.msra.mxu0 0.0
    %238 = vmatprep.subr.mxu0 0.0
    %239 = vmatpush2.msra.mxu0 0.0
    %240 = vmatprep.subr.mxu0 0.0
    %241 = vmatpush2.msra.mxu0 0.0
    %242 = vmatprep.subr.mxu0 0.0
    %243 = vmatpush2.msra.mxu0 0.0
    %244 = vmatprep.subr.mxu0 0.0
    %245 = vmatpush2.msra.mxu0 0.0
    %246 = vmatprep.subr.mxu0 0.0
    %247 = vmatpush2.msra.mxu0 0.0
    %248 = vmatprep.subr.mxu0 0.0
    %249 = vmatpush2.msra.mxu0 0.0
    %250 = vmatprep.subr.mxu0 0.0
    %251 = vmatpush2.msra.mxu0 0.0
    %252 = vmatprep.subr.mxu0 0.0
    %253 = vmatpush2.msra.mxu0 0.0
    %254 = vmatprep.subr.mxu0 0.0
    %255 = vmatpush2.msra.mxu0 0.0
    %256 = vmatprep.mubr.f32.mxu0 0.0
    %257 = vmatmul.mubr.f32.gmra.mxu0 %v167
    %v258 = vpop.f32.mrf.mxu0
    %v259 = vadd.f32 %v190, %v258
    %v260 = vpop.f32.mrf.mxu0
    %261 = vmatprep.mubr.f32.mxu0 0.0
    %262 = vmatmul.mubr.f32.gmra.mxu0 %v168
    %v263 = vpop.f32.mrf.mxu0
    %v264 = vadd.f32 %v190, %v263
    %v265 = vpop.f32.mrf.mxu0
    %266 = vdwg.mxu0
    %v267 = vmax.f32 %v259, 0.0
    %v268 = vmax.f32 %v264, 0.0
    %v269 = vld [vmem:[#allocation6] sm:$0xff]
    %v270 = vld [vmem:[#allocation6 + $0x8] sm:$0xff]
    %v271 = vld [vmem:[#allocation6 + $0x10] sm:$0xff]
    %v272 = vld [vmem:[#allocation6 + $0x18] sm:$0xff]
    %v273 = vld [vmem:[#allocation6 + $0x20] sm:$0xff]
    %v274 = vld [vmem:[#allocation6 + $0x28] sm:$0xff]
    %v275 = vld [vmem:[#allocation6 + $0x30] sm:$0xff]
    %v276 = vld [vmem:[#allocation6 + $0x38] sm:$0xff]
    %v277 = vld [vmem:[#allocation6 + $0x40] sm:$0xff]
    %v278 = vld [vmem:[#allocation6 + $0x48] sm:$0xff]
    %v279 = vld [vmem:[#allocation6 + $0x50] sm:$0xff]
    %v280 = vld [vmem:[#allocation6 + $0x58] sm:$0xff]
    %v281 = vld [vmem:[#allocation6 + $0x60] sm:$0xff]
    %v282 = vld [vmem:[#allocation6 + $0x68] sm:$0xff]
    %v283 = vld [vmem:[#allocation6 + $0x70] sm:$0xff]
    %v284 = vld [vmem:[#allocation6 + $0x78] sm:$0xff]
    %v285 = vld [vmem:[%s6] sm:$0x1]
    %v287 = vlaneseq
    %v288 = vshrl.u32 %v287, 7
    %v289 = vsub.s32 0, %v288
    %v290 = vrot.slane %v285, %v289
    %292 = vmatprep.subr.mxu0 0.0
    %293 = vmatpush1.msra.mxu0 %v284
    %294 = vmatprep.subr.mxu0 0.0
    %295 = vmatpush1.msra.mxu0 %v283
    %296 = vmatprep.subr.mxu0 0.0
    %297 = vmatpush1.msra.mxu0 %v282
    %298 = vmatprep.subr.mxu0 0.0
    %299 = vmatpush1.msra.mxu0 %v281
    %300 = vmatprep.subr.mxu0 0.0
    %301 = vmatpush1.msra.mxu0 %v280
    %302 = vmatprep.subr.mxu0 0.0
    %303 = vmatpush1.msra.mxu0 %v279
    %304 = vmatprep.subr.mxu0 0.0
    %305 = vmatpush1.msra.mxu0 %v278
    %306 = vmatprep.subr.mxu0 0.0
    %307 = vmatpush1.msra.mxu0 %v277
    %308 = vmatprep.subr.mxu0 0.0
    %309 = vmatpush1.msra.mxu0 %v276
    %310 = vmatprep.subr.mxu0 0.0
    %311 = vmatpush1.msra.mxu0 %v275
    %312 = vmatprep.subr.mxu0 0.0
    %313 = vmatpush1.msra.mxu0 %v274
    %314 = vmatprep.subr.mxu0 0.0
    %315 = vmatpush1.msra.mxu0 %v273
    %316 = vmatprep.subr.mxu0 0.0
    %317 = vmatpush1.msra.mxu0 %v272
    %318 = vmatprep.subr.mxu0 0.0
    %319 = vmatpush1.msra.mxu0 %v271
    %320 = vmatprep.subr.mxu0 0.0
    %321 = vmatpush1.msra.mxu0 %v270
    %322 = vmatprep.subr.mxu0 0.0
    %323 = vmatpush1.msra.mxu0 %v269
    %324 = vmatprep.subr.mxu0 0.0
    %325 = vmatpush2.msra.mxu0 0.0
    %326 = vmatprep.subr.mxu0 0.0
    %327 = vmatpush2.msra.mxu0 0.0
    %328 = vmatprep.subr.mxu0 0.0
    %329 = vmatpush2.msra.mxu0 0.0
    %330 = vmatprep.subr.mxu0 0.0
    %331 = vmatpush2.msra.mxu0 0.0
    %332 = vmatprep.subr.mxu0 0.0
    %333 = vmatpush2.msra.mxu0 0.0
    %334 = vmatprep.subr.mxu0 0.0
    %335 = vmatpush2.msra.mxu0 0.0
    %336 = vmatprep.subr.mxu0 0.0
    %337 = vmatpush2.msra.mxu0 0.0
    %338 = vmatprep.subr.mxu0 0.0
    %339 = vmatpush2.msra.mxu0 0.0
    %340 = vmatprep.subr.mxu0 0.0
    %341 = vmatpush2.msra.mxu0 0.0
    %342 = vmatprep.subr.mxu0 0.0
    %343 = vmatpush2.msra.mxu0 0.0
    %344 = vmatprep.subr.mxu0 0.0
    %345 = vmatpush2.msra.mxu0 0.0
    %346 = vmatprep.subr.mxu0 0.0
    %347 = vmatpush2.msra.mxu0 0.0
    %348 = vmatprep.subr.mxu0 0.0
    %349 = vmatpush2.msra.mxu0 0.0
    %350 = vmatprep.subr.mxu0 0.0
    %351 = vmatpush2.msra.mxu0 0.0
    %352 = vmatprep.subr.mxu0 0.0
    %353 = vmatpush2.msra.mxu0 0.0
    %354 = vmatprep.subr.mxu0 0.0
    %355 = vmatpush2.msra.mxu0 0.0
    %356 = vmatprep.mubr.f32.mxu0 0.0
    %357 = vmatmul.mubr.f32.gmra.mxu0 %v267
    %v358 = vpop.f32.mrf.mxu0
    %v359 = vadd.f32 %v290, %v358
    %v360 = vpop.f32.mrf.mxu0
    %361 = vmatprep.mubr.f32.mxu0 0.0
    %362 = vmatmul.mubr.f32.gmra.mxu0 %v268
    %v363 = vpop.f32.mrf.mxu0
    %v364 = vadd.f32 %v290, %v363
    %v365 = vpop.f32.mrf.mxu0
    %366 = vdwg.mxu0
    %v367 = vxor.u32 %v359, 2147483648
    %v368 = vxor.u32 %v364, 2147483648
    %v369 = vmul.f32 %v367, 1.442695
    %v370 = vpow.pop %v369
    %v371 = vmul.f32 %v368, 1.442695
    %v372 = vpow.pop %v371
    %v373 = vadd.f32 %v370, 1.0
    %v374 = vadd.f32 %v372, 1.0
    %v375 = vrcp.pop %v373
    %v376 = vmul.f32 1.0, %v375
    %v377 = vrcp.pop %v374
    %v378 = vmul.f32 1.0, %v377
    %379 = vst [vmem:[%s7] sm:$0xff] %v376
    %380 = vst [vmem:[%s7 + $0x8] sm:$0xff] %v378
    // Predicated region
    $region42: #{mlp_forward.1} parent=1 // pred_check
      _
    $region43: #{mlp_forward.1} parent=1 // pred_check_branch
      %382 = sbr.rel (0) target = $region45
    $region44: #{mlp_forward.1} parent=1 // pred_region
      _
    $region45: #{mlp_forward.1} parent=1 // pred_fallthru
      _
    // Predicated region
    $region46: #{mlp_forward.1} parent=1 // pred_check
      _
    $region47: #{mlp_forward.1} parent=1 // pred_check_branch
      %384 = sbr.rel (0) target = $region49
    $region48: #{mlp_forward.1} parent=1 // pred_region
      _
    $region49: #{mlp_forward.1} parent=1 // pred_fallthru
      _
    %385 = vsyncpa [#allocation3], 1
    %386 = vsyncpa [#allocation5], 1

</llo_original>
